<compile_context>
chip_gen: v6e
topology: v6e:2x2x1
jax: 0.10.0
libtpu: 0.0.40
codegen_flags: <defaults>
</compile_context>

<pallas_src>
import functools

import jax
import jax.numpy as jnp
from jax import lax
from jax.experimental import pallas as pl
from jax.experimental.pallas import tpu as pltpu

_LANE = 128
_SUBLANE = 8


def _round_up(n, m):
    return ((n + m - 1) // m) * m


def _vmem_limit_bytes(*block_byte_sizes):
    """Generous VMEM budget: 2x (double-buffering) every block + margin."""
    total = 2 * sum(int(b) for b in block_byte_sizes) + (2 << 20)
    return int(min(100 << 20, max(16 << 20, total)))


# ---------------------------------------------------------------------------
# Generic tiled matmul + bias kernel:  out[M,N] = x[M,K] @ w[K,N] + b[1,N]
# Used for (a) the hoisted input projection over all T*B rows and (b) the
# final h2o projection.  K and N must be 128-multiples (wrapper pads).
# ---------------------------------------------------------------------------
def _matmul_bias_kernel(x_ref, w_ref, b_ref, o_ref):
    o_ref[...] = (jnp.dot(x_ref[...], w_ref[...],
                          preferred_element_type=jnp.float32)
                  + b_ref[...]).astype(o_ref.dtype)


def _matmul_bias(x, w, b, *, max_row_tile=256):
    m, k = x.shape
    k2, n = w.shape
    assert k == k2 and k % _LANE == 0 and n % _LANE == 0
    row_tile = min(_round_up(m, _SUBLANE), _round_up(max_row_tile, _SUBLANE))
    mp = _round_up(m, row_tile)
    if mp != m:
        x = jnp.pad(x, ((0, mp - m), (0, 0)))

    limit = _vmem_limit_bytes(
        row_tile * k * jnp.dtype(x.dtype).itemsize,
        k * n * jnp.dtype(w.dtype).itemsize,
        n * 4,
        row_tile * n * 4)

    out = pl.pallas_call(
        _matmul_bias_kernel,
        out_shape=jax.ShapeDtypeStruct((mp, n), jnp.float32),
        grid_spec=pltpu.PrefetchScalarGridSpec(
            num_scalar_prefetch=0,
            grid=(mp // row_tile,),
            in_specs=[
                pl.BlockSpec((row_tile, k), lambda i: (i, 0)),   # x rows
                pl.BlockSpec((k, n), lambda i: (0, 0)),          # weights
                pl.BlockSpec((1, n), lambda i: (0, 0)),          # bias
            ],
            out_specs=pl.BlockSpec((row_tile, n), lambda i: (i, 0)),
        ),
        compiler_params=pltpu.CompilerParams(
            dimension_semantics=("parallel",),
            vmem_limit_bytes=limit),
    )(x, w, b)
    return out[:m]


# ---------------------------------------------------------------------------
# Recurrent kernel: one grid step == T_BLK LSTM timesteps (unrolled).
# h/c persist in VMEM scratch across grid steps.
# ---------------------------------------------------------------------------
def _lstm_recurrent_kernel(xp_ref, h0_ref, c0_ref, whh_ref, hn_ref, cn_ref,
                           h_s, c_s, *, t_blk, nt, hp, mm_dtype):
    g = pl.program_id(0)

    @pl.when(g == 0)
    def _():
        h_s[...] = h0_ref[...]
        c_s[...] = c0_ref[...]

    whh = whh_ref[...]                        # (hp, 4*hp), VMEM-resident

    def step(j, carry):
        h, c = carry
        # gates = x_proj[t] + h @ W_hh^T  (input projection + biases hoisted)
        gates = xp_ref[j] + jnp.dot(h.astype(mm_dtype), whh,
                                    preferred_element_type=jnp.float32)
        # hp == 128*k -> lane-aligned gate slices (no cross-lane moves).
        i_g = jax.nn.sigmoid(gates[:, 0 * hp:1 * hp])
        f_g = jax.nn.sigmoid(gates[:, 1 * hp:2 * hp])
        g_g = jnp.tanh(gates[:, 2 * hp:3 * hp])
        o_g = jax.nn.sigmoid(gates[:, 3 * hp:4 * hp])
        c_new = f_g * c + i_g * g_g
        h_new = o_g * jnp.tanh(c_new)
        # Mask tail-padded timesteps (time was padded up to a T_BLK multiple).
        valid = (g * t_blk + j) < nt
        return jnp.where(valid, h_new, h), jnp.where(valid, c_new, c)

    h, c = lax.fori_loop(0, t_blk, step, (h_s[...], c_s[...]), unroll=True)
    h_s[...] = h
    c_s[...] = c
    # Unconditional write every grid step (constant output index_map -> only
    # the final writeback goes to HBM); no stale-VMEM hazard.
    hn_ref[...] = h
    cn_ref[...] = c


# ---------------------------------------------------------------------------
# Parameter preparation: transpose, per-gate lane-pad, optional bf16 cast.
# ---------------------------------------------------------------------------
def prepare_params(raw, input_size, nhidden, latent_dim,
                   matmul_dtype=jnp.float32):
    """raw uses PyTorch layout: w_ih [4H,I], w_hh [4H,H], b_* [4H],
    w_ho [2L,H], b_ho [2L]."""
    ip = _round_up(input_size, _LANE)
    hp = _round_up(nhidden, _LANE)
    op = _round_up(2 * latent_dim, _LANE)

    w_ih_t = raw["w_ih"].T              # [I, 4H]
    w_hh_t = raw["w_hh"].T              # [H, 4H]
    b = raw["b_ih"] + raw["b_hh"]       # [4H]  (pre-summed biases)

    w_x = jnp.zeros((ip, 4 * hp), jnp.float32)
    w_h = jnp.zeros((hp, 4 * hp), jnp.float32)
    b_g = jnp.zeros((1, 4 * hp), jnp.float32)
    for k in range(4):  # gate order i, f, g, o; each gate in its own 128-lane block
        w_x = w_x.at[:input_size, k * hp:k * hp + nhidden].set(
            w_ih_t[:, k * nhidden:(k + 1) * nhidden])
        w_h = w_h.at[:nhidden, k * hp:k * hp + nhidden].set(
            w_hh_t[:, k * nhidden:(k + 1) * nhidden])
        b_g = b_g.at[0, k * hp:k * hp + nhidden].set(
            b[k * nhidden:(k + 1) * nhidden])

    w_ho = jnp.zeros((hp, op), jnp.float32)
    w_ho = w_ho.at[:nhidden, :2 * latent_dim].set(raw["w_ho"].T)
    b_ho = jnp.zeros((1, op), jnp.float32)
    b_ho = b_ho.at[0, :2 * latent_dim].set(raw["b_ho"])

    return {
        "w_x": w_x.astype(matmul_dtype),       # input->gates weights
        "w_hh": w_h.astype(matmul_dtype),      # hidden->gates weights
        "b_gates": b_g,                        # biases / elementwise stay f32
        "w_ho": w_ho.astype(matmul_dtype),
        "b_ho": b_ho,
        "dims": (input_size, nhidden, latent_dim, ip, hp, op),
        "matmul_dtype": matmul_dtype,
    }


# ---------------------------------------------------------------------------
# Wrappers
# ---------------------------------------------------------------------------
def lstm_encoder_sequence(x_seq, h0, c0, prepared, reverse=True, t_blk=8):
    """Run the LSTM over a whole sequence.

    x_seq: [B, T, I] (PyTorch layout), h0/c0: [B, H].
    Returns (out, hn, cn) of the final processed step (t=0 when reverse=True,
    exactly LSTMEncoder.forward_sequence)."""
    input_size, nhidden, latent_dim, ip, hp, op = prepared["dims"]
    mm_dtype = prepared["matmul_dtype"]
    batch, nt, _ = x_seq.shape
    bp = _round_up(batch, _SUBLANE)

    t_blk = max(1, min(t_blk, nt))
    ntp = _round_up(nt, t_blk)

    # Time-major; flip time ONCE here (forward_sequence processes t = T-1..0).
    x_tm = jnp.transpose(x_seq, (1, 0, 2))
    if reverse:
        x_tm = x_tm[::-1]
    # Zero-padding keeps the math exact: padded lanes stay identically 0;
    # padded tail timesteps are masked inside the recurrent kernel.
    x_tm = jnp.pad(x_tm, ((0, ntp - nt), (0, bp - batch),
                          (0, ip - input_size)))

    # 1) Hoisted input projection over ALL timesteps: one big MXU matmul
    #    (M = ntp*bp rows instead of B rows per serial step), bias included.
    x_flat = x_tm.reshape(ntp * bp, ip).astype(mm_dtype)
    x_proj = _matmul_bias(x_flat, prepared["w_x"], prepared["b_gates"])
    x_proj = x_proj.reshape(ntp, bp, 4 * hp)

    h0_p = jnp.pad(h0, ((0, bp - batch), (0, hp - nhidden))).astype(jnp.float32)
    c0_p = jnp.pad(c0, ((0, bp - batch), (0, hp - nhidden))).astype(jnp.float32)

    # 2) Recurrence: one pallas_call, T_BLK timesteps per grid step.
    w_hh = prepared["w_hh"]
    limit = _vmem_limit_bytes(
        t_blk * bp * 4 * hp * 4,                              # x_proj block
        2 * bp * hp * 4,                                      # h0, c0
        w_hh.size * jnp.dtype(w_hh.dtype).itemsize,           # W_hh
        2 * bp * hp * 4,                                      # hn, cn outputs
        2 * bp * hp * 4)                                      # scratch h, c
    kernel = functools.partial(_lstm_recurrent_kernel, t_blk=t_blk, nt=nt,
                               hp=hp, mm_dtype=mm_dtype)
    hn_p, cn_p = pl.pallas_call(
        kernel,
        out_shape=(jax.ShapeDtypeStruct((bp, hp), jnp.float32),
                   jax.ShapeDtypeStruct((bp, hp), jnp.float32)),
        grid_spec=pltpu.PrefetchScalarGridSpec(
            num_scalar_prefetch=0,
            grid=(ntp // t_blk,),
            in_specs=[
                pl.BlockSpec((t_blk, bp, 4 * hp), lambda g: (g, 0, 0)),  # x_proj
                pl.BlockSpec((bp, hp), lambda g: (0, 0)),                # h0
                pl.BlockSpec((bp, hp), lambda g: (0, 0)),                # c0
                pl.BlockSpec((hp, 4 * hp), lambda g: (0, 0)),            # W_hh
            ],
            out_specs=(pl.BlockSpec((bp, hp), lambda g: (0, 0)),         # hn
                       pl.BlockSpec((bp, hp), lambda g: (0, 0))),        # cn
            scratch_shapes=[pltpu.VMEM((bp, hp), jnp.float32),           # h state
                            pltpu.VMEM((bp, hp), jnp.float32)],          # c state
        ),
        compiler_params=pltpu.CompilerParams(
            dimension_semantics=("arbitrary",),   # time is sequential
            vmem_limit_bytes=limit),
    )(x_proj, h0_p, c0_p, w_hh)

    # 3) h2o projection once, OUTSIDE the recurrent loop (its weights never
    #    occupy VMEM during the time loop).
    out_p = _matmul_bias(hn_p.astype(mm_dtype), prepared["w_ho"],
                         prepared["b_ho"])

    return (out_p[:batch, :2 * latent_dim],
            hn_p[:batch, :nhidden],
            cn_p[:batch, :nhidden])


def lstm_encoder_forward(x, h, c, prepared):
    """Single LSTMEncoder.forward step: x:[B,I], h/c:[B,H] -> (out, hn, cn)."""
    return lstm_encoder_sequence(x[:, None, :], h, c, prepared,
                                 reverse=False, t_blk=1)


# ---------------------------------------------------------------------------
# Pure-JAX references (PyTorch-layout weights)
# ---------------------------------------------------------------------------
def _reference_step(x, h, c, raw):
    gates = (x @ raw["w_ih"].T + raw["b_ih"] + h @ raw["w_hh"].T + raw["b_hh"])
    nh = h.shape[1]
    i = jax.nn.sigmoid(gates[:, 0 * nh:1 * nh])
    f = jax.nn.sigmoid(gates[:, 1 * nh:2 * nh])
    g = jnp.tanh(gates[:, 2 * nh:3 * nh])
    o = jax.nn.sigmoid(gates[:, 3 * nh:4 * nh])
    cn = f * c + i * g
    hn = o * jnp.tanh(cn)
    out = hn @ raw["w_ho"].T + raw["b_ho"]
    return out, hn, cn


def _reference_sequence(x_seq, h, c, raw, reverse=True):
    ts = range(x_seq.shape[1])
    for t in (reversed(ts) if reverse else ts):
        out, h, c = _reference_step(x_seq[:, t, :], h, c, raw)
    return out, h, c


def init_raw_params(key, input_size, nhidden, latent_dim):
    ks = jax.random.split(key, 6)
    bound = 1.0 / jnp.sqrt(nhidden)
    u = lambda k, shp: jax.random.uniform(k, shp, jnp.float32, -bound, bound)
    return {
        "w_ih": u(ks[0], (4 * nhidden, input_size)),
        "w_hh": u(ks[1], (4 * nhidden, nhidden)),
        "b_ih": u(ks[2], (4 * nhidden,)),
        "b_hh": u(ks[3], (4 * nhidden,)),
        "w_ho": u(ks[4], (2 * latent_dim, nhidden)),
        "b_ho": u(ks[5], (2 * latent_dim,)),
    }


if __name__ == "__main__":
    # Small shapes; batch < 8 and seq_len not a multiple of t_blk exercise the
    # batch-sublane padding and the tail-timestep masking paths.
    batch, input_size, nhidden, latent_dim, seq_len = 4, 16, 32, 8, 11

    key = jax.random.PRNGKey(0)
    kx, kxs, kh, kc, kp = jax.random.split(key, 5)
    raw = init_raw_params(kp, input_size, nhidden, latent_dim)

    # --- single step (LSTMEncoder.forward), f32 matmuls ---
    x = jax.random.normal(kx, (batch, input_size), jnp.float32)
    h = jax.random.normal(kh, (batch, nhidden), jnp.float32)
    c = jax.random.normal(kc, (batch, nhidden), jnp.float32)

    prep_f32 = prepare_params(raw, input_size, nhidden, latent_dim, jnp.float32)
    out, hn, cn = lstm_encoder_forward(x, h, c, prep_f32)
    jax.block_until_ready((out, hn, cn))
    ro, rh, rc = _reference_step(x, h, c, raw)
    assert jnp.allclose(out, ro, atol=1e-4, rtol=1e-4)
    assert jnp.allclose(hn, rh, atol=1e-4, rtol=1e-4)
    assert jnp.allclose(cn, rc, atol=1e-4, rtol=1e-4)

    # --- full sequence (LSTMEncoder.forward_sequence: reversed time, zero init) ---
    x_seq = jax.random.normal(kxs, (batch, seq_len, input_size), jnp.float32)
    h0 = jnp.zeros((batch, nhidden), jnp.float32)
    c0 = jnp.zeros((batch, nhidden), jnp.float32)
    out_s, hn_s, cn_s = lstm_encoder_sequence(x_seq, h0, c0, prep_f32,
                                              reverse=True, t_blk=8)
    jax.block_until_ready((out_s, hn_s, cn_s))
    rso, rsh, rsc = _reference_sequence(x_seq, h0, c0, raw, reverse=True)
    assert jnp.allclose(out_s, rso, atol=5e-4, rtol=5e-4)
    assert jnp.allclose(hn_s, rsh, atol=5e-4, rtol=5e-4)
    assert jnp.allclose(cn_s, rsc, atol=5e-4, rtol=5e-4)

    # --- bf16 matmul-operand variant (v6e/v7x MXU path; gate math stays f32).
    # TODO(synk): bf16 rounding of h compounds over very long sequences;
    # validated here at T=11 against a 5e-2 tolerance.
    prep_bf16 = prepare_params(raw, input_size, nhidden, latent_dim,
                               jnp.bfloat16)
    out_b, hn_b, cn_b = lstm_encoder_sequence(x_seq, h0, c0, prep_bf16,
                                              reverse=True, t_blk=8)
    jax.block_until_ready((out_b, hn_b, cn_b))
    assert jnp.allclose(out_b, rso, atol=5e-2, rtol=5e-2)
    assert jnp.allclose(hn_b, rsh, atol=5e-2, rtol=5e-2)

    print("KERNEL_OK")
</pallas_src>

<mosaic_0001>
module attributes {stable_mosaic.version = 11 : i64} {
  func.func @_matmul_bias_kernel(%arg0: i32, %arg1: memref<8x128xf32, #tpu.memory_space<vmem>>, %arg2: memref<128x512xf32, #tpu.memory_space<vmem>>, %arg3: memref<1x512xf32, #tpu.memory_space<vmem>>, %arg4: memref<8x512xf32, #tpu.memory_space<vmem>>) attributes {dimension_semantics = [#tpu.dimension_semantics<parallel>], iteration_bounds = array<i64: 1>, scalar_prefetch = 0 : i64, scratch_operands = 0 : i64, tpu.core_type = #tpu.core_type<tc>, window_params = [{transform_indices = @transform_0, window_bounds = array<i64: 8, 128>}, {pipeline_mode = #tpu.pipeline_mode<synchronous>, transform_indices = @transform_1, window_bounds = array<i64: 128, 512>}, {pipeline_mode = #tpu.pipeline_mode<synchronous>, transform_indices = @transform_2, window_bounds = array<i64: 1, 512>}, {transform_indices = @transform_3, window_bounds = array<i64: 8, 512>}]} {
    %c0 = arith.constant 0 : index
    %c0_0 = arith.constant 0 : index
    %0 = vector.load %arg1[%c0, %c0_0] : memref<8x128xf32, #tpu.memory_space<vmem>>, vector<8x128xf32>
    %c0_1 = arith.constant 0 : index
    %c0_2 = arith.constant 0 : index
    %1 = vector.load %arg2[%c0_1, %c0_2] : memref<128x512xf32, #tpu.memory_space<vmem>>, vector<128x512xf32>
    %cst = arith.constant dense<0.000000e+00> : vector<8x512xf32>
    %2 = tpu.matmul %0, %1, %cst {dimension_numbers = #tpu.dot_dimension_numbers<[1], [0], [0], [1], [0, 0, 1, 1], [], []>} : vector<8x128xf32>, vector<128x512xf32>, vector<8x512xf32> -> vector<8x512xf32>
    %c0_3 = arith.constant 0 : index
    %c0_4 = arith.constant 0 : index
    %3 = vector.load %arg3[%c0_3, %c0_4] : memref<1x512xf32, #tpu.memory_space<vmem>>, vector<1x512xf32>
    %4 = vector.broadcast %3 : vector<1x512xf32> to vector<8x512xf32>
    %5 = arith.addf %2, %4 : vector<8x512xf32>
    %c0_5 = arith.constant 0 : index
    %c0_6 = arith.constant 0 : index
    %6 = vector.load %arg4[%c0_5, %c0_6] : memref<8x512xf32, #tpu.memory_space<vmem>>, vector<8x512xf32>
    tpu.vector_store %arg4[%c0_5, %c0_6], %5 {strides = array<i32>} : memref<8x512xf32, #tpu.memory_space<vmem>>, vector<8x512xf32>,
    return
  }
  func.func @transform_0(%arg0: i32) -> (i32, i32) {
    %c0_i32 = arith.constant 0 : i32
    %c0_i32_0 = arith.constant 0 : i32
    return %arg0, %c0_i32 : i32, i32
  }
  func.func @transform_1(%arg0: i32) -> (i32, i32) {
    %c0_i32 = arith.constant 0 : i32
    %c0_i32_0 = arith.constant 0 : i32
    %c0_i32_1 = arith.constant 0 : i32
    return %c0_i32, %c0_i32_0 : i32, i32
  }
  func.func @transform_2(%arg0: i32) -> (i32, i32) {
    %c0_i32 = arith.constant 0 : i32
    %c0_i32_0 = arith.constant 0 : i32
    %c0_i32_1 = arith.constant 0 : i32
    return %c0_i32, %c0_i32_0 : i32, i32
  }
  func.func @transform_3(%arg0: i32) -> (i32, i32) {
    %c0_i32 = arith.constant 0 : i32
    %c0_i32_0 = arith.constant 0 : i32
    return %arg0, %c0_i32 : i32, i32
  }
}

</mosaic_0001>

<llo_original>
// kernel: tpu_custom_call.1
$region0: #{tpu_custom_call.1}
  #allocation0 [shape = 'u32[]', space=smem, size = 0x4, offset = 0x4, fixed_abs, tag = 'smem constant byte address 0x4 - core index']
  #allocation1 [shape = 'u32[144,128]{1,0:T(1,128)}', space=vmem, size = 0x12000, scoped, tag = 'internal scratch']
  %s0 = inlined_call_operand.hbm [shape: f32[8,128], index: 0, kind: input, shape index: {}]
  %s1 = inlined_call_operand.hbm [shape: f32[128,512], index: 1, kind: input, shape index: {}]
  %s2 = inlined_call_operand.hbm [shape: f32[1,512], index: 2, kind: input, shape index: {}]
  %s3 = inlined_call_operand.hbm [shape: f32[8,512], index: 3, kind: output, shape index: {}]
  %s4 = sld [smem:[#allocation0]]
  $region34: #{tpu_custom_call.1} parent=0
    _
  %s6 = ssub.s32 1, %s4
  %s7 = scalar_select 0, %s6, %s4
  $region1: #{tpu_custom_call.1} parent=0
    #allocation2 [shape = 'u8[4096]{0}', space=vmem, size = 0x1000, scoped, tag = 'input window, operand 0, single buffered']
    #allocation3 [shape = 's32[1]{0}', space=sflag, size = 0x4, scoped, tag = 'scoped memory for tpu_custom_call.1']
    #allocation4 [shape = 's32[1]{0}', space=sflag, size = 0x4, scoped, tag = 'scoped memory for tpu_custom_call.1']
    #allocation5 [shape = 'u8[262144]{0}', space=vmem, size = 0x40000, scoped, tag = 'input window, operand 1, single buffered']
    #allocation6 [shape = 's32[1]{0}', space=sflag, size = 0x4, scoped, tag = 'scoped memory for tpu_custom_call.1']
    #allocation7 [shape = 'u8[2048]{0}', space=vmem, size = 0x800, scoped, tag = 'input window, operand 2, single buffered']
    #allocation8 [shape = 'u8[16384]{0}', space=vmem, size = 0x4000, scoped, tag = 'output window, operand 0, single buffered']
    %8 = vsyncpa [#allocation3], 0
    %9 = vsyncpa [#allocation6], 0
    %10 = vsyncpa [#allocation4], 0
    // Predicated region
    $region2: #{tpu_custom_call.1} parent=1 // pred_check
      _
    $region3: #{tpu_custom_call.1} parent=1 // pred_check_branch
      %12 = sbr.rel (0) target = $region5
    $region4: #{tpu_custom_call.1} parent=1 // pred_region
      %s14 = ssub.s32 128, 128
      %15 = vsyncadd [#allocation3], %s14
      %s17 = sshll.u32 [#allocation2], 4
      %s18 = int_to_ptr.vmem [resolvable:$true] %s17
      %20 = dma.hbm_to_vmem [thread:$0]  %s0, 128, %s18, [#allocation3]
    $region5: #{tpu_custom_call.1} parent=1 // pred_fallthru
      _
    // Predicated region
    $region6: #{tpu_custom_call.1} parent=1 // pred_check
      _
    $region7: #{tpu_custom_call.1} parent=1 // pred_check_branch
      %22 = sbr.rel (0) target = $region9
    $region8: #{tpu_custom_call.1} parent=1 // pred_region
      %s24 = ssub.s32 8192, 8192
      %25 = vsyncadd [#allocation6], %s24
      %s26 = sshll.u32 [#allocation5], 4
      %s27 = int_to_ptr.vmem [resolvable:$true] %s26
      %32 = dma.hbm_to_vmem [thread:$0]  %s1, 8192, %s27, [#allocation6], 512, 512, 32
    $region9: #{tpu_custom_call.1} parent=1 // pred_fallthru
      _
    // Predicated region
    $region10: #{tpu_custom_call.1} parent=1 // pred_check
      _
    $region11: #{tpu_custom_call.1} parent=1 // pred_check_branch
      %34 = sbr.rel (0) target = $region13
    $region12: #{tpu_custom_call.1} parent=1 // pred_region
      %s36 = ssub.s32 64, 64
      %37 = vsyncadd [#allocation6], %s36
      %s39 = sshll.u32 [#allocation7], 4
      %s40 = int_to_ptr.vmem [resolvable:$true] %s39
      %42 = dma.hbm_to_vmem [thread:$0]  %s2, 64, %s40, [#allocation6]
    $region13: #{tpu_custom_call.1} parent=1 // pred_fallthru
      _
    // Predicated region
    $region14: #{tpu_custom_call.1} parent=1 // pred_check
      _
    $region15: #{tpu_custom_call.1} parent=1 // pred_check_branch
      %44 = sbr.rel (0) target = $region17
    $region16: #{tpu_custom_call.1} parent=1 // pred_region
      %45 = dma.done [#allocation3], 128
    $region17: #{tpu_custom_call.1} parent=1 // pred_fallthru
      _
    // Predicated region
    $region18: #{tpu_custom_call.1} parent=1 // pred_check
      _
    $region19: #{tpu_custom_call.1} parent=1 // pred_check_branch
      %47 = sbr.rel (0) target = $region21
    $region20: #{tpu_custom_call.1} parent=1 // pred_region
      %48 = dma.done [#allocation6], 8192
    $region21: #{tpu_custom_call.1} parent=1 // pred_fallthru
      _
    // Predicated region
    $region22: #{tpu_custom_call.1} parent=1 // pred_check
      _
    $region23: #{tpu_custom_call.1} parent=1 // pred_check_branch
      %50 = sbr.rel (0) target = $region25
    $region24: #{tpu_custom_call.1} parent=1 // pred_region
      %51 = dma.done [#allocation6], 64
    $region25: #{tpu_custom_call.1} parent=1 // pred_fallthru
      _
    %v52 = vld [vmem:[#allocation2] sm:$0xff]
    %v53 = vld [vmem:[#allocation5] sm:$0xff]
    %v54 = vld [vmem:[#allocation5 + $0x8] sm:$0xff]
    %v55 = vld [vmem:[#allocation5 + $0x10] sm:$0xff]
    %v56 = vld [vmem:[#allocation5 + $0x18] sm:$0xff]
    %v57 = vld [vmem:[#allocation5 + $0x20] sm:$0xff]
    %v58 = vld [vmem:[#allocation5 + $0x28] sm:$0xff]
    %v59 = vld [vmem:[#allocation5 + $0x30] sm:$0xff]
    %v60 = vld [vmem:[#allocation5 + $0x38] sm:$0xff]
    %v61 = vld [vmem:[#allocation5 + $0x40] sm:$0xff]
    %v62 = vld [vmem:[#allocation5 + $0x48] sm:$0xff]
    %v63 = vld [vmem:[#allocation5 + $0x50] sm:$0xff]
    %v64 = vld [vmem:[#allocation5 + $0x58] sm:$0xff]
    %v65 = vld [vmem:[#allocation5 + $0x60] sm:$0xff]
    %v66 = vld [vmem:[#allocation5 + $0x68] sm:$0xff]
    %v67 = vld [vmem:[#allocation5 + $0x70] sm:$0xff]
    %v68 = vld [vmem:[#allocation5 + $0x78] sm:$0xff]
    %v69 = vld [vmem:[#allocation5 + $0x80] sm:$0xff]
    %v70 = vld [vmem:[#allocation5 + $0x88] sm:$0xff]
    %v71 = vld [vmem:[#allocation5 + $0x90] sm:$0xff]
    %v72 = vld [vmem:[#allocation5 + $0x98] sm:$0xff]
    %v73 = vld [vmem:[#allocation5 + $0xa0] sm:$0xff]
    %v74 = vld [vmem:[#allocation5 + $0xa8] sm:$0xff]
    %v75 = vld [vmem:[#allocation5 + $0xb0] sm:$0xff]
    %v76 = vld [vmem:[#allocation5 + $0xb8] sm:$0xff]
    %v77 = vld [vmem:[#allocation5 + $0xc0] sm:$0xff]
    %v78 = vld [vmem:[#allocation5 + $0xc8] sm:$0xff]
    %v79 = vld [vmem:[#allocation5 + $0xd0] sm:$0xff]
    %v80 = vld [vmem:[#allocation5 + $0xd8] sm:$0xff]
    %v81 = vld [vmem:[#allocation5 + $0xe0] sm:$0xff]
    %v82 = vld [vmem:[#allocation5 + $0xe8] sm:$0xff]
    %v83 = vld [vmem:[#allocation5 + $0xf0] sm:$0xff]
    %v84 = vld [vmem:[#allocation5 + $0xf8] sm:$0xff]
    %v85 = vld [vmem:[#allocation5 + $0x100] sm:$0xff]
    %v86 = vld [vmem:[#allocation5 + $0x108] sm:$0xff]
    %v87 = vld [vmem:[#allocation5 + $0x110] sm:$0xff]
    %v88 = vld [vmem:[#allocation5 + $0x118] sm:$0xff]
    %v89 = vld [vmem:[#allocation5 + $0x120] sm:$0xff]
    %v90 = vld [vmem:[#allocation5 + $0x128] sm:$0xff]
    %v91 = vld [vmem:[#allocation5 + $0x130] sm:$0xff]
    %v92 = vld [vmem:[#allocation5 + $0x138] sm:$0xff]
    %v93 = vld [vmem:[#allocation5 + $0x140] sm:$0xff]
    %v94 = vld [vmem:[#allocation5 + $0x148] sm:$0xff]
    %v95 = vld [vmem:[#allocation5 + $0x150] sm:$0xff]
    %v96 = vld [vmem:[#allocation5 + $0x158] sm:$0xff]
    %v97 = vld [vmem:[#allocation5 + $0x160] sm:$0xff]
    %v98 = vld [vmem:[#allocation5 + $0x168] sm:$0xff]
    %v99 = vld [vmem:[#allocation5 + $0x170] sm:$0xff]
    %v100 = vld [vmem:[#allocation5 + $0x178] sm:$0xff]
    %v101 = vld [vmem:[#allocation5 + $0x180] sm:$0xff]
    %v102 = vld [vmem:[#allocation5 + $0x188] sm:$0xff]
    %v103 = vld [vmem:[#allocation5 + $0x190] sm:$0xff]
    %v104 = vld [vmem:[#allocation5 + $0x198] sm:$0xff]
    %v105 = vld [vmem:[#allocation5 + $0x1a0] sm:$0xff]
    %v106 = vld [vmem:[#allocation5 + $0x1a8] sm:$0xff]
    %v107 = vld [vmem:[#allocation5 + $0x1b0] sm:$0xff]
    %v108 = vld [vmem:[#allocation5 + $0x1b8] sm:$0xff]
    %v109 = vld [vmem:[#allocation5 + $0x1c0] sm:$0xff]
    %v110 = vld [vmem:[#allocation5 + $0x1c8] sm:$0xff]
    %v111 = vld [vmem:[#allocation5 + $0x1d0] sm:$0xff]
    %v112 = vld [vmem:[#allocation5 + $0x1d8] sm:$0xff]
    %v113 = vld [vmem:[#allocation5 + $0x1e0] sm:$0xff]
    %v114 = vld [vmem:[#allocation5 + $0x1e8] sm:$0xff]
    %v115 = vld [vmem:[#allocation5 + $0x1f0] sm:$0xff]
    %v116 = vld [vmem:[#allocation5 + $0x1f8] sm:$0xff]
    %v117 = vld [vmem:[#allocation7] sm:$0xf]
    %v119 = vlaneseq
    %v120 = vshrl.u32 %v119, 7
    %v121 = vsub.s32 0, %v120
    %v122 = vrot.slane %v117, %v121
    %v123 = vlaneseq
    %v124 = vshrl.u32 %v123, 7
    %v125 = vsub.s32 1, %v124
    %v126 = vrot.slane %v117, %v125
    %v127 = vlaneseq
    %v128 = vshrl.u32 %v127, 7
    %v129 = vsub.s32 2, %v128
    %v130 = vrot.slane %v117, %v129
    %v131 = vlaneseq
    %v132 = vshrl.u32 %v131, 7
    %v133 = vsub.s32 3, %v132
    %v134 = vrot.slane %v117, %v133
    %139 = vmatprep.subr.mxu0 %v114
    %140 = vmatpush1.msra.mxu0 %v113
    %141 = vmatprep.subr.mxu0 %v110
    %142 = vmatpush1.msra.mxu0 %v109
    %143 = vmatprep.subr.mxu0 %v106
    %144 = vmatpush1.msra.mxu0 %v105
    %145 = vmatprep.subr.mxu0 %v102
    %146 = vmatpush1.msra.mxu0 %v101
    %147 = vmatprep.subr.mxu0 %v98
    %148 = vmatpush1.msra.mxu0 %v97
    %149 = vmatprep.subr.mxu0 %v94
    %150 = vmatpush1.msra.mxu0 %v93
    %151 = vmatprep.subr.mxu0 %v90
    %152 = vmatpush1.msra.mxu0 %v89
    %153 = vmatprep.subr.mxu0 %v86
    %154 = vmatpush1.msra.mxu0 %v85
    %155 = vmatprep.subr.mxu0 %v82
    %156 = vmatpush1.msra.mxu0 %v81
    %157 = vmatprep.subr.mxu0 %v78
    %158 = vmatpush1.msra.mxu0 %v77
    %159 = vmatprep.subr.mxu0 %v74
    %160 = vmatpush1.msra.mxu0 %v73
    %161 = vmatprep.subr.mxu0 %v70
    %162 = vmatpush1.msra.mxu0 %v69
    %163 = vmatprep.subr.mxu0 %v66
    %164 = vmatpush1.msra.mxu0 %v65
    %165 = vmatprep.subr.mxu0 %v62
    %166 = vmatpush1.msra.mxu0 %v61
    %167 = vmatprep.subr.mxu0 %v58
    %168 = vmatpush1.msra.mxu0 %v57
    %169 = vmatprep.subr.mxu0 %v54
    %170 = vmatpush1.msra.mxu0 %v53
    %171 = vmatprep.subr.mxu0 0.0
    %172 = vmatpush2.msra.mxu0 0.0
    %173 = vmatprep.subr.mxu0 0.0
    %174 = vmatpush2.msra.mxu0 0.0
    %175 = vmatprep.subr.mxu0 0.0
    %176 = vmatpush2.msra.mxu0 0.0
    %177 = vmatprep.subr.mxu0 0.0
    %178 = vmatpush2.msra.mxu0 0.0
    %179 = vmatprep.subr.mxu0 0.0
    %180 = vmatpush2.msra.mxu0 0.0
    %181 = vmatprep.subr.mxu0 0.0
    %182 = vmatpush2.msra.mxu0 0.0
    %183 = vmatprep.subr.mxu0 0.0
    %184 = vmatpush2.msra.mxu0 0.0
    %185 = vmatprep.subr.mxu0 0.0
    %186 = vmatpush2.msra.mxu0 0.0
    %187 = vmatprep.subr.mxu0 0.0
    %188 = vmatpush2.msra.mxu0 0.0
    %189 = vmatprep.subr.mxu0 0.0
    %190 = vmatpush2.msra.mxu0 0.0
    %191 = vmatprep.subr.mxu0 0.0
    %192 = vmatpush2.msra.mxu0 0.0
    %193 = vmatprep.subr.mxu0 0.0
    %194 = vmatpush2.msra.mxu0 0.0
    %195 = vmatprep.subr.mxu0 0.0
    %196 = vmatpush2.msra.mxu0 0.0
    %197 = vmatprep.subr.mxu0 0.0
    %198 = vmatpush2.msra.mxu0 0.0
    %199 = vmatprep.subr.mxu0 0.0
    %200 = vmatpush2.msra.mxu0 0.0
    %201 = vmatprep.subr.mxu0 0.0
    %202 = vmatpush2.msra.mxu0 0.0
    %203 = vmatprep.mubr.f32.mxu0 0.0
    %204 = vmatmul.mubr.f32.gmra.mxu0 %v52
    %v205 = vpop.f32.mrf.mxu0
    %v206 = vadd.f32 %v122, %v205
    %v207 = vpop.f32.mrf.mxu0
    %v208 = vadd.f32 %v126, %v207
    %209 = vdwg.mxu0
    %210 = vmatprep.subr.mxu0 %v116
    %211 = vmatpush1.msra.mxu0 %v115
    %212 = vmatprep.subr.mxu0 %v112
    %213 = vmatpush1.msra.mxu0 %v111
    %214 = vmatprep.subr.mxu0 %v108
    %215 = vmatpush1.msra.mxu0 %v107
    %216 = vmatprep.subr.mxu0 %v104
    %217 = vmatpush1.msra.mxu0 %v103
    %218 = vmatprep.subr.mxu0 %v100
    %219 = vmatpush1.msra.mxu0 %v99
    %220 = vmatprep.subr.mxu0 %v96
    %221 = vmatpush1.msra.mxu0 %v95
    %222 = vmatprep.subr.mxu0 %v92
    %223 = vmatpush1.msra.mxu0 %v91
    %224 = vmatprep.subr.mxu0 %v88
    %225 = vmatpush1.msra.mxu0 %v87
    %226 = vmatprep.subr.mxu0 %v84
    %227 = vmatpush1.msra.mxu0 %v83
    %228 = vmatprep.subr.mxu0 %v80
    %229 = vmatpush1.msra.mxu0 %v79
    %230 = vmatprep.subr.mxu0 %v76
    %231 = vmatpush1.msra.mxu0 %v75
    %232 = vmatprep.subr.mxu0 %v72
    %233 = vmatpush1.msra.mxu0 %v71
    %234 = vmatprep.subr.mxu0 %v68
    %235 = vmatpush1.msra.mxu0 %v67
    %236 = vmatprep.subr.mxu0 %v64
    %237 = vmatpush1.msra.mxu0 %v63
    %238 = vmatprep.subr.mxu0 %v60
    %239 = vmatpush1.msra.mxu0 %v59
    %240 = vmatprep.subr.mxu0 %v56
    %241 = vmatpush1.msra.mxu0 %v55
    %242 = vmatprep.subr.mxu0 0.0
    %243 = vmatpush2.msra.mxu0 0.0
    %244 = vmatprep.subr.mxu0 0.0
    %245 = vmatpush2.msra.mxu0 0.0
    %246 = vmatprep.subr.mxu0 0.0
    %247 = vmatpush2.msra.mxu0 0.0
    %248 = vmatprep.subr.mxu0 0.0
    %249 = vmatpush2.msra.mxu0 0.0
    %250 = vmatprep.subr.mxu0 0.0
    %251 = vmatpush2.msra.mxu0 0.0
    %252 = vmatprep.subr.mxu0 0.0
    %253 = vmatpush2.msra.mxu0 0.0
    %254 = vmatprep.subr.mxu0 0.0
    %255 = vmatpush2.msra.mxu0 0.0
    %256 = vmatprep.subr.mxu0 0.0
    %257 = vmatpush2.msra.mxu0 0.0
    %258 = vmatprep.subr.mxu0 0.0
    %259 = vmatpush2.msra.mxu0 0.0
    %260 = vmatprep.subr.mxu0 0.0
    %261 = vmatpush2.msra.mxu0 0.0
    %262 = vmatprep.subr.mxu0 0.0
    %263 = vmatpush2.msra.mxu0 0.0
    %264 = vmatprep.subr.mxu0 0.0
    %265 = vmatpush2.msra.mxu0 0.0
    %266 = vmatprep.subr.mxu0 0.0
    %267 = vmatpush2.msra.mxu0 0.0
    %268 = vmatprep.subr.mxu0 0.0
    %269 = vmatpush2.msra.mxu0 0.0
    %270 = vmatprep.subr.mxu0 0.0
    %271 = vmatpush2.msra.mxu0 0.0
    %272 = vmatprep.subr.mxu0 0.0
    %273 = vmatpush2.msra.mxu0 0.0
    %274 = vmatprep.mubr.f32.mxu0 0.0
    %275 = vmatmul.mubr.f32.gmra.mxu0 %v52
    %v276 = vpop.f32.mrf.mxu0
    %v277 = vadd.f32 %v130, %v276
    %v278 = vpop.f32.mrf.mxu0
    %v279 = vadd.f32 %v134, %v278
    %280 = vdwg.mxu0
    %281 = vst [vmem:[#allocation8] sm:$0xff] %v206
    %282 = vst [vmem:[#allocation8 + $0x8] sm:$0xff] %v208
    %283 = vst [vmem:[#allocation8 + $0x10] sm:$0xff] %v277
    %284 = vst [vmem:[#allocation8 + $0x18] sm:$0xff] %v279
    // Predicated region
    $region26: #{tpu_custom_call.1} parent=1 // pred_check
      _
    $region27: #{tpu_custom_call.1} parent=1 // pred_check_branch
      %286 = sbr.rel (0) target = $region29
    $region28: #{tpu_custom_call.1} parent=1 // pred_region
      %s288 = ssub.s32 512, 512
      %289 = vsyncadd [#allocation4], %s288
      %s291 = sshll.u32 [#allocation8], 4
      %s292 = int_to_ptr.vmem [resolvable:$true] %s291
      %294 = dma.vmem_to_hbm [thread:$0]  %s292, 512, %s3, [#allocation4]
    $region29: #{tpu_custom_call.1} parent=1 // pred_fallthru
      _
    // Predicated region
    $region30: #{tpu_custom_call.1} parent=1 // pred_check
      _
    $region31: #{tpu_custom_call.1} parent=1 // pred_check_branch
      %296 = sbr.rel (0) target = $region33
    $region32: #{tpu_custom_call.1} parent=1 // pred_region
      %297 = dma.done [#allocation4], 512
    $region33: #{tpu_custom_call.1} parent=1 // pred_fallthru
      _
    %298 = vsyncpa [#allocation3], 1
    %299 = vsyncpa [#allocation6], 1
    %300 = vsyncpa [#allocation4], 1

</llo_original>
